<compile_context>
chip_gen: v5e
topology: v5e:2x2
jax: 0.10.0
libtpu: 0.0.40
codegen_flags: <defaults>
</compile_context>

<pallas_src>
import functools

import jax
import jax.numpy as jnp
from jax.experimental import pallas as pl
from jax.experimental.pallas import tpu as pltpu


def _tensorcores_per_chip() -> int:
    """Best-effort TensorCores-per-chip detection (v7x has 2, v5e/v6e have 1)."""
    try:
        kind = jax.devices()[0].device_kind.lower()
    except Exception:
        return 1
    return 2 if ("v7" in kind or "7x" in kind) else 1


# ----------------------------- Pallas kernel -------------------------------
def _fused_conv_relu_kernel(x_ref, w_ref, b_ref, o_ref, xs_ref, *, NB, C, K, W, HW):
    """Conv(KxK, stride 1 over the full grid) + bias + ReLU for NB images.

    x_ref : (NB, C, Lpad)   zero-padded, row-major flattened images (idx h*W + w)
    w_ref : (Cout, K*K*C)   lane-dense repacked weights, col = (kh*K + kw)*C + c
    b_ref : (Cout, 1)       bias column
    o_ref : (NB, Cout, HW)  stride-1 conv over the full HxW grid, flattened
    xs_ref: (K*K*C, HW)     VMEM scratch: im2col-stacked shifted slices
    """
    w = w_ref[...]
    b = b_ref[...]
    for n in range(NB):
        # Build the stacked im2col matrix with K*K static shifted-slice stores.
        for kh in range(K):
            for kw in range(K):
                tap = kh * K + kw
                off = kh * W + kw                            # static lane offset
                xs_ref[pl.ds(tap * C, C), :] = x_ref[n, :, pl.ds(off, HW)]
        # One MXU contraction over the full K*K*C depth, f32 accumulation.
        acc = jnp.dot(w, xs_ref[...], preferred_element_type=jnp.float32)
        o_ref[n] = jnp.maximum(acc + b, 0.0).astype(o_ref.dtype)


# ------------------------------- wrapper ------------------------------------
@functools.partial(jax.jit, static_argnames=("kernel_size", "stride"))
def hidden_layer_forward(x, weight, bias, *, kernel_size, stride):
    """Equivalent of: F.relu(nn.Conv2d(C_in, dict_size, K, stride)(x)).

    x:      (N, C_in, H, W)            float32, NCHW (PyTorch convention)
    weight: (dict_size, C_in, K, K)    float32
    bias:   (dict_size,)               float32
    returns (N, dict_size, H_out, W_out)
    """
    N, C, H, W = x.shape
    Cout = weight.shape[0]
    K, S = kernel_size, stride
    Ho = (H - K) // S + 1
    Wo = (W - K) // S + 1

    HW = H * W                                   # wide (stride-1, full-grid) columns
    need = HW + (K - 1) * W + (K - 1)            # max flat index touched + 1
    Lpad = ((need + 127) // 128) * 128           # lane-aligned padded length
    # NOTE: Lpad must cover `need`, AND the final crop below must discard the
    # wrapped right/bottom-edge outputs -- these two are coupled; keep them in sync.
    assert Lpad >= need

    # Grid layout: one batch element per "parallel" grid step on multi-TC chips
    # (v7x: each TC takes one image); a single grid step with an internal batch
    # loop on single-TC chips (v5e/v6e) to skip per-grid-step pipeline overhead.
    if _tensorcores_per_chip() >= 2 and N > 1:
        G, NB = N, 1
    else:
        G, NB = 1, N

    # Flatten spatial dims (free) and zero-pad the lane axis (single pad op).
    x_flat = jnp.pad(x.reshape(N, C, HW), ((0, 0), (0, 0), (0, Lpad - HW)))

    # Lane-dense repacked weights: w2[co, (kh*K + kw)*C + c] = weight[co, c, kh, kw]
    w2 = weight.transpose(0, 2, 3, 1).reshape(Cout, K * K * C)
    b_col = bias.reshape(Cout, 1)

    kernel = functools.partial(
        _fused_conv_relu_kernel, NB=NB, C=C, K=K, W=W, HW=HW)

    y_wide = pl.pallas_call(
        kernel,
        out_shape=jax.ShapeDtypeStruct((N, Cout, HW), jnp.float32),
        grid_spec=pltpu.PrefetchScalarGridSpec(
            num_scalar_prefetch=0,
            grid=(G,),
            in_specs=[
                pl.BlockSpec((NB, C, Lpad), lambda g: (g, 0, 0)),      # NB images
                pl.BlockSpec((Cout, K * K * C), lambda g: (0, 0)),     # weights
                pl.BlockSpec((Cout, 1), lambda g: (0, 0)),             # bias
            ],
            out_specs=pl.BlockSpec((NB, Cout, HW), lambda g: (g, 0, 0)),
            scratch_shapes=[pltpu.VMEM((K * K * C, HW), jnp.float32)],
        ),
        compiler_params=pltpu.CompilerParams(
            dimension_semantics=("parallel",),   # one batch element per TC on v7x
        ),
    )(x_flat, w2, b_col)

    # The kernel computed the stride-1 conv over the full HxW grid; subsample and
    # crop to the valid strided output window (free reshape + one cheap slice).
    # TODO(synk): for stride > 1, build xs_stacked only at strided output columns
    # inside the kernel to avoid the S^2 wasted MXU work and store bandwidth.
    y = y_wide.reshape(N, Cout, H, W)[:, :, 0:S * Ho:S, 0:S * Wo:S]
    return y


# --------------------------------- main -------------------------------------
if __name__ == "__main__":
    # Module hyperparameters (small, consistent with the PyTorch module)
    dictionary_size = 32
    dict_kernel_size = 3
    dict_stride = 1
    nb_channels_in = 4

    # Deterministic synthetic parameters / input
    key = jax.random.PRNGKey(0)
    kx, kw, kb = jax.random.split(key, 3)

    x = jax.random.normal(kx, (2, nb_channels_in, 16, 16), dtype=jnp.float32)
    fan_in = nb_channels_in * dict_kernel_size * dict_kernel_size
    weight = jax.random.normal(
        kw, (dictionary_size, nb_channels_in, dict_kernel_size, dict_kernel_size),
        dtype=jnp.float32) * (1.0 / jnp.sqrt(fan_in))
    bias = jax.random.normal(kb, (dictionary_size,), dtype=jnp.float32) * 0.1

    out = hidden_layer_forward(
        x, weight, bias, kernel_size=dict_kernel_size, stride=dict_stride)
    out = jax.block_until_ready(out)

    # Reference check against XLA's conv (same semantics as PyTorch Conv2d, no padding)
    ref = jax.lax.conv_general_dilated(
        x, weight, window_strides=(dict_stride, dict_stride), padding="VALID",
        dimension_numbers=("NCHW", "OIHW", "NCHW"))
    ref = jnp.maximum(ref + bias[None, :, None, None], 0.0)

    assert out.shape == (2, dictionary_size, 14, 14), out.shape
    err = float(jnp.max(jnp.abs(out - ref)))
    assert jnp.allclose(out, ref, atol=1e-3, rtol=1e-3), err

    print("KERNEL_OK")
</pallas_src>

<mosaic_0001>
module attributes {stable_mosaic.version = 11 : i64} {
  func.func @_fused_conv_relu_kernel(%arg0: i32, %arg1: memref<2x4x384xf32, #tpu.memory_space<vmem>>, %arg2: memref<32x36xf32, #tpu.memory_space<vmem>>, %arg3: memref<32x1xf32, #tpu.memory_space<vmem>>, %arg4: memref<2x32x256xf32, #tpu.memory_space<vmem>>, %arg5: memref<36x256xf32, #tpu.memory_space<vmem>>) attributes {dimension_semantics = [#tpu.dimension_semantics<parallel>], iteration_bounds = array<i64: 1>, scalar_prefetch = 0 : i64, scratch_operands = 1 : i64, tpu.core_type = #tpu.core_type<tc>, window_params = [{transform_indices = @transform_0, window_bounds = array<i64: 2, 4, 384>}, {pipeline_mode = #tpu.pipeline_mode<synchronous>, transform_indices = @transform_1, window_bounds = array<i64: 32, 36>}, {pipeline_mode = #tpu.pipeline_mode<synchronous>, transform_indices = @transform_2, window_bounds = array<i64: 32, 1>}, {transform_indices = @transform_3, window_bounds = array<i64: 2, 32, 256>}]} {
    %c0 = arith.constant 0 : index
    %c0_0 = arith.constant 0 : index
    %0 = vector.load %arg2[%c0, %c0_0] : memref<32x36xf32, #tpu.memory_space<vmem>>, vector<32x36xf32>
    %c0_1 = arith.constant 0 : index
    %c0_2 = arith.constant 0 : index
    %1 = vector.load %arg3[%c0_1, %c0_2] : memref<32x1xf32, #tpu.memory_space<vmem>>, vector<32x1xf32>
    %c0_3 = arith.constant 0 : index
    %c0_4 = arith.constant 0 : index
    %c0_5 = arith.constant 0 : index
    %2 = vector.load %arg1[%c0_3, %c0_4, %c0_5] : memref<2x4x384xf32, #tpu.memory_space<vmem>>, vector<1x4x256xf32>
    %3 = vector.shape_cast %2 : vector<1x4x256xf32> to vector<4x256xf32>
    %c0_6 = arith.constant 0 : index
    %c0_7 = arith.constant 0 : index
    %4 = vector.load %arg5[%c0_6, %c0_7] : memref<36x256xf32, #tpu.memory_space<vmem>>, vector<4x256xf32>
    tpu.vector_store %arg5[%c0_6, %c0_7], %3 {strides = array<i32>} : memref<36x256xf32, #tpu.memory_space<vmem>>, vector<4x256xf32>,
    %c0_8 = arith.constant 0 : index
    %c0_9 = arith.constant 0 : index
    %c1 = arith.constant 1 : index
    %5 = vector.load %arg1[%c0_8, %c0_9, %c1] : memref<2x4x384xf32, #tpu.memory_space<vmem>>, vector<1x4x256xf32>
    %6 = vector.shape_cast %5 : vector<1x4x256xf32> to vector<4x256xf32>
    %c4 = arith.constant 4 : index
    %c0_10 = arith.constant 0 : index
    %7 = vector.load %arg5[%c4, %c0_10] : memref<36x256xf32, #tpu.memory_space<vmem>>, vector<4x256xf32>
    tpu.vector_store %arg5[%c4, %c0_10], %6 {strides = array<i32>} : memref<36x256xf32, #tpu.memory_space<vmem>>, vector<4x256xf32>,
    %c0_11 = arith.constant 0 : index
    %c0_12 = arith.constant 0 : index
    %c2 = arith.constant 2 : index
    %8 = vector.load %arg1[%c0_11, %c0_12, %c2] : memref<2x4x384xf32, #tpu.memory_space<vmem>>, vector<1x4x256xf32>
    %9 = vector.shape_cast %8 : vector<1x4x256xf32> to vector<4x256xf32>
    %c8 = arith.constant 8 : index
    %c0_13 = arith.constant 0 : index
    %10 = vector.load %arg5[%c8, %c0_13] : memref<36x256xf32, #tpu.memory_space<vmem>>, vector<4x256xf32>
    tpu.vector_store %arg5[%c8, %c0_13], %9 {strides = array<i32>} : memref<36x256xf32, #tpu.memory_space<vmem>>, vector<4x256xf32>,
    %c0_14 = arith.constant 0 : index
    %c0_15 = arith.constant 0 : index
    %c16 = arith.constant 16 : index
    %11 = vector.load %arg1[%c0_14, %c0_15, %c16] : memref<2x4x384xf32, #tpu.memory_space<vmem>>, vector<1x4x256xf32>
    %12 = vector.shape_cast %11 : vector<1x4x256xf32> to vector<4x256xf32>
    %c12 = arith.constant 12 : index
    %c0_16 = arith.constant 0 : index
    %13 = vector.load %arg5[%c12, %c0_16] : memref<36x256xf32, #tpu.memory_space<vmem>>, vector<4x256xf32>
    tpu.vector_store %arg5[%c12, %c0_16], %12 {strides = array<i32>} : memref<36x256xf32, #tpu.memory_space<vmem>>, vector<4x256xf32>,
    %c0_17 = arith.constant 0 : index
    %c0_18 = arith.constant 0 : index
    %c17 = arith.constant 17 : index
    %14 = vector.load %arg1[%c0_17, %c0_18, %c17] : memref<2x4x384xf32, #tpu.memory_space<vmem>>, vector<1x4x256xf32>
    %15 = vector.shape_cast %14 : vector<1x4x256xf32> to vector<4x256xf32>
    %c16_19 = arith.constant 16 : index
    %c0_20 = arith.constant 0 : index
    %16 = vector.load %arg5[%c16_19, %c0_20] : memref<36x256xf32, #tpu.memory_space<vmem>>, vector<4x256xf32>
    tpu.vector_store %arg5[%c16_19, %c0_20], %15 {strides = array<i32>} : memref<36x256xf32, #tpu.memory_space<vmem>>, vector<4x256xf32>,
    %c0_21 = arith.constant 0 : index
    %c0_22 = arith.constant 0 : index
    %c18 = arith.constant 18 : index
    %17 = vector.load %arg1[%c0_21, %c0_22, %c18] : memref<2x4x384xf32, #tpu.memory_space<vmem>>, vector<1x4x256xf32>
    %18 = vector.shape_cast %17 : vector<1x4x256xf32> to vector<4x256xf32>
    %c20 = arith.constant 20 : index
    %c0_23 = arith.constant 0 : index
    %19 = vector.load %arg5[%c20, %c0_23] : memref<36x256xf32, #tpu.memory_space<vmem>>, vector<4x256xf32>
    tpu.vector_store %arg5[%c20, %c0_23], %18 {strides = array<i32>} : memref<36x256xf32, #tpu.memory_space<vmem>>, vector<4x256xf32>,
    %c0_24 = arith.constant 0 : index
    %c0_25 = arith.constant 0 : index
    %c32 = arith.constant 32 : index
    %20 = vector.load %arg1[%c0_24, %c0_25, %c32] : memref<2x4x384xf32, #tpu.memory_space<vmem>>, vector<1x4x256xf32>
    %21 = vector.shape_cast %20 : vector<1x4x256xf32> to vector<4x256xf32>
    %c24 = arith.constant 24 : index
    %c0_26 = arith.constant 0 : index
    %22 = vector.load %arg5[%c24, %c0_26] : memref<36x256xf32, #tpu.memory_space<vmem>>, vector<4x256xf32>
    tpu.vector_store %arg5[%c24, %c0_26], %21 {strides = array<i32>} : memref<36x256xf32, #tpu.memory_space<vmem>>, vector<4x256xf32>,
    %c0_27 = arith.constant 0 : index
    %c0_28 = arith.constant 0 : index
    %c33 = arith.constant 33 : index
    %23 = vector.load %arg1[%c0_27, %c0_28, %c33] : memref<2x4x384xf32, #tpu.memory_space<vmem>>, vector<1x4x256xf32>
    %24 = vector.shape_cast %23 : vector<1x4x256xf32> to vector<4x256xf32>
    %c28 = arith.constant 28 : index
    %c0_29 = arith.constant 0 : index
    %25 = vector.load %arg5[%c28, %c0_29] : memref<36x256xf32, #tpu.memory_space<vmem>>, vector<4x256xf32>
    tpu.vector_store %arg5[%c28, %c0_29], %24 {strides = array<i32>} : memref<36x256xf32, #tpu.memory_space<vmem>>, vector<4x256xf32>,
    %c0_30 = arith.constant 0 : index
    %c0_31 = arith.constant 0 : index
    %c34 = arith.constant 34 : index
    %26 = vector.load %arg1[%c0_30, %c0_31, %c34] : memref<2x4x384xf32, #tpu.memory_space<vmem>>, vector<1x4x256xf32>
    %27 = vector.shape_cast %26 : vector<1x4x256xf32> to vector<4x256xf32>
    %c32_32 = arith.constant 32 : index
    %c0_33 = arith.constant 0 : index
    %28 = vector.load %arg5[%c32_32, %c0_33] : memref<36x256xf32, #tpu.memory_space<vmem>>, vector<4x256xf32>
    tpu.vector_store %arg5[%c32_32, %c0_33], %27 {strides = array<i32>} : memref<36x256xf32, #tpu.memory_space<vmem>>, vector<4x256xf32>,
    %c0_34 = arith.constant 0 : index
    %c0_35 = arith.constant 0 : index
    %29 = vector.load %arg5[%c0_34, %c0_35] : memref<36x256xf32, #tpu.memory_space<vmem>>, vector<36x256xf32>
    %cst = arith.constant dense<0.000000e+00> : vector<32x256xf32>
    %30 = tpu.matmul %0, %29, %cst {dimension_numbers = #tpu.dot_dimension_numbers<[1], [0], [0], [1], [0, 0, 1, 1], [], []>} : vector<32x36xf32>, vector<36x256xf32>, vector<32x256xf32> -> vector<32x256xf32>
    %31 = vector.broadcast %1 : vector<32x1xf32> to vector<32x256xf32>
    %32 = arith.addf %30, %31 : vector<32x256xf32>
    %cst_36 = arith.constant 0.000000e+00 : f32
    %33 = vector.broadcast %cst_36 : f32 to vector<32x256xf32>
    %34 = arith.maximumf %32, %33 : vector<32x256xf32>
    %c0_37 = arith.constant 0 : index
    %c0_38 = arith.constant 0 : index
    %c0_39 = arith.constant 0 : index
    %35 = vector.load %arg4[%c0_37, %c0_38, %c0_39] : memref<2x32x256xf32, #tpu.memory_space<vmem>>, vector<1x32x256xf32>
    %36 = vector.shape_cast %35 : vector<1x32x256xf32> to vector<32x256xf32>
    %37 = vector.shape_cast %34 : vector<32x256xf32> to vector<1x32x256xf32>
    tpu.vector_store %arg4[%c0_37, %c0_38, %c0_39], %37 {strides = array<i32>} : memref<2x32x256xf32, #tpu.memory_space<vmem>>, vector<1x32x256xf32>,
    %c1_40 = arith.constant 1 : index
    %c0_41 = arith.constant 0 : index
    %c0_42 = arith.constant 0 : index
    %38 = vector.load %arg1[%c1_40, %c0_41, %c0_42] : memref<2x4x384xf32, #tpu.memory_space<vmem>>, vector<1x4x256xf32>
    %39 = vector.shape_cast %38 : vector<1x4x256xf32> to vector<4x256xf32>
    %c0_43 = arith.constant 0 : index
    %c0_44 = arith.constant 0 : index
    %40 = vector.load %arg5[%c0_43, %c0_44] : memref<36x256xf32, #tpu.memory_space<vmem>>, vector<4x256xf32>
    tpu.vector_store %arg5[%c0_43, %c0_44], %39 {strides = array<i32>} : memref<36x256xf32, #tpu.memory_space<vmem>>, vector<4x256xf32>,
    %c1_45 = arith.constant 1 : index
    %c0_46 = arith.constant 0 : index
    %c1_47 = arith.constant 1 : index
    %41 = vector.load %arg1[%c1_45, %c0_46, %c1_47] : memref<2x4x384xf32, #tpu.memory_space<vmem>>, vector<1x4x256xf32>
    %42 = vector.shape_cast %41 : vector<1x4x256xf32> to vector<4x256xf32>
    %c4_48 = arith.constant 4 : index
    %c0_49 = arith.constant 0 : index
    %43 = vector.load %arg5[%c4_48, %c0_49] : memref<36x256xf32, #tpu.memory_space<vmem>>, vector<4x256xf32>
    tpu.vector_store %arg5[%c4_48, %c0_49], %42 {strides = array<i32>} : memref<36x256xf32, #tpu.memory_space<vmem>>, vector<4x256xf32>,
    %c1_50 = arith.constant 1 : index
    %c0_51 = arith.constant 0 : index
    %c2_52 = arith.constant 2 : index
    %44 = vector.load %arg1[%c1_50, %c0_51, %c2_52] : memref<2x4x384xf32, #tpu.memory_space<vmem>>, vector<1x4x256xf32>
    %45 = vector.shape_cast %44 : vector<1x4x256xf32> to vector<4x256xf32>
    %c8_53 = arith.constant 8 : index
    %c0_54 = arith.constant 0 : index
    %46 = vector.load %arg5[%c8_53, %c0_54] : memref<36x256xf32, #tpu.memory_space<vmem>>, vector<4x256xf32>
    tpu.vector_store %arg5[%c8_53, %c0_54], %45 {strides = array<i32>} : memref<36x256xf32, #tpu.memory_space<vmem>>, vector<4x256xf32>,
    %c1_55 = arith.constant 1 : index
    %c0_56 = arith.constant 0 : index
    %c16_57 = arith.constant 16 : index
    %47 = vector.load %arg1[%c1_55, %c0_56, %c16_57] : memref<2x4x384xf32, #tpu.memory_space<vmem>>, vector<1x4x256xf32>
    %48 = vector.shape_cast %47 : vector<1x4x256xf32> to vector<4x256xf32>
    %c12_58 = arith.constant 12 : index
    %c0_59 = arith.constant 0 : index
    %49 = vector.load %arg5[%c12_58, %c0_59] : memref<36x256xf32, #tpu.memory_space<vmem>>, vector<4x256xf32>
    tpu.vector_store %arg5[%c12_58, %c0_59], %48 {strides = array<i32>} : memref<36x256xf32, #tpu.memory_space<vmem>>, vector<4x256xf32>,
    %c1_60 = arith.constant 1 : index
    %c0_61 = arith.constant 0 : index
    %c17_62 = arith.constant 17 : index
    %50 = vector.load %arg1[%c1_60, %c0_61, %c17_62] : memref<2x4x384xf32, #tpu.memory_space<vmem>>, vector<1x4x256xf32>
    %51 = vector.shape_cast %50 : vector<1x4x256xf32> to vector<4x256xf32>
    %c16_63 = arith.constant 16 : index
    %c0_64 = arith.constant 0 : index
    %52 = vector.load %arg5[%c16_63, %c0_64] : memref<36x256xf32, #tpu.memory_space<vmem>>, vector<4x256xf32>
    tpu.vector_store %arg5[%c16_63, %c0_64], %51 {strides = array<i32>} : memref<36x256xf32, #tpu.memory_space<vmem>>, vector<4x256xf32>,
    %c1_65 = arith.constant 1 : index
    %c0_66 = arith.constant 0 : index
    %c18_67 = arith.constant 18 : index
    %53 = vector.load %arg1[%c1_65, %c0_66, %c18_67] : memref<2x4x384xf32, #tpu.memory_space<vmem>>, vector<1x4x256xf32>
    %54 = vector.shape_cast %53 : vector<1x4x256xf32> to vector<4x256xf32>
    %c20_68 = arith.constant 20 : index
    %c0_69 = arith.constant 0 : index
    %55 = vector.load %arg5[%c20_68, %c0_69] : memref<36x256xf32, #tpu.memory_space<vmem>>, vector<4x256xf32>
    tpu.vector_store %arg5[%c20_68, %c0_69], %54 {strides = array<i32>} : memref<36x256xf32, #tpu.memory_space<vmem>>, vector<4x256xf32>,
    %c1_70 = arith.constant 1 : index
    %c0_71 = arith.constant 0 : index
    %c32_72 = arith.constant 32 : index
    %56 = vector.load %arg1[%c1_70, %c0_71, %c32_72] : memref<2x4x384xf32, #tpu.memory_space<vmem>>, vector<1x4x256xf32>
    %57 = vector.shape_cast %56 : vector<1x4x256xf32> to vector<4x256xf32>
    %c24_73 = arith.constant 24 : index
    %c0_74 = arith.constant 0 : index
    %58 = vector.load %arg5[%c24_73, %c0_74] : memref<36x256xf32, #tpu.memory_space<vmem>>, vector<4x256xf32>
    tpu.vector_store %arg5[%c24_73, %c0_74], %57 {strides = array<i32>} : memref<36x256xf32, #tpu.memory_space<vmem>>, vector<4x256xf32>,
    %c1_75 = arith.constant 1 : index
    %c0_76 = arith.constant 0 : index
    %c33_77 = arith.constant 33 : index
    %59 = vector.load %arg1[%c1_75, %c0_76, %c33_77] : memref<2x4x384xf32, #tpu.memory_space<vmem>>, vector<1x4x256xf32>
    %60 = vector.shape_cast %59 : vector<1x4x256xf32> to vector<4x256xf32>
    %c28_78 = arith.constant 28 : index
    %c0_79 = arith.constant 0 : index
    %61 = vector.load %arg5[%c28_78, %c0_79] : memref<36x256xf32, #tpu.memory_space<vmem>>, vector<4x256xf32>
    tpu.vector_store %arg5[%c28_78, %c0_79], %60 {strides = array<i32>} : memref<36x256xf32, #tpu.memory_space<vmem>>, vector<4x256xf32>,
    %c1_80 = arith.constant 1 : index
    %c0_81 = arith.constant 0 : index
    %c34_82 = arith.constant 34 : index
    %62 = vector.load %arg1[%c1_80, %c0_81, %c34_82] : memref<2x4x384xf32, #tpu.memory_space<vmem>>, vector<1x4x256xf32>
    %63 = vector.shape_cast %62 : vector<1x4x256xf32> to vector<4x256xf32>
    %c32_83 = arith.constant 32 : index
    %c0_84 = arith.constant 0 : index
    %64 = vector.load %arg5[%c32_83, %c0_84] : memref<36x256xf32, #tpu.memory_space<vmem>>, vector<4x256xf32>
    tpu.vector_store %arg5[%c32_83, %c0_84], %63 {strides = array<i32>} : memref<36x256xf32, #tpu.memory_space<vmem>>, vector<4x256xf32>,
    %c0_85 = arith.constant 0 : index
    %c0_86 = arith.constant 0 : index
    %65 = vector.load %arg5[%c0_85, %c0_86] : memref<36x256xf32, #tpu.memory_space<vmem>>, vector<36x256xf32>
    %cst_87 = arith.constant dense<0.000000e+00> : vector<32x256xf32>
    %66 = tpu.matmul %0, %65, %cst_87 {dimension_numbers = #tpu.dot_dimension_numbers<[1], [0], [0], [1], [0, 0, 1, 1], [], []>} : vector<32x36xf32>, vector<36x256xf32>, vector<32x256xf32> -> vector<32x256xf32>
    %67 = vector.broadcast %1 : vector<32x1xf32> to vector<32x256xf32>
    %68 = arith.addf %66, %67 : vector<32x256xf32>
    %cst_88 = arith.constant 0.000000e+00 : f32
    %69 = vector.broadcast %cst_88 : f32 to vector<32x256xf32>
    %70 = arith.maximumf %68, %69 : vector<32x256xf32>
    %c1_89 = arith.constant 1 : index
    %c0_90 = arith.constant 0 : index
    %c0_91 = arith.constant 0 : index
    %71 = vector.load %arg4[%c1_89, %c0_90, %c0_91] : memref<2x32x256xf32, #tpu.memory_space<vmem>>, vector<1x32x256xf32>
    %72 = vector.shape_cast %71 : vector<1x32x256xf32> to vector<32x256xf32>
    %73 = vector.shape_cast %70 : vector<32x256xf32> to vector<1x32x256xf32>
    tpu.vector_store %arg4[%c1_89, %c0_90, %c0_91], %73 {strides = array<i32>} : memref<2x32x256xf32, #tpu.memory_space<vmem>>, vector<1x32x256xf32>,
    return
  }
  func.func @transform_0(%arg0: i32) -> (i32, i32, i32) {
    %c0_i32 = arith.constant 0 : i32
    %c0_i32_0 = arith.constant 0 : i32
    %c0_i32_1 = arith.constant 0 : i32
    return %arg0, %c0_i32, %c0_i32_0 : i32, i32, i32
  }
  func.func @transform_1(%arg0: i32) -> (i32, i32) {
    %c0_i32 = arith.constant 0 : i32
    %c0_i32_0 = arith.constant 0 : i32
    %c0_i32_1 = arith.constant 0 : i32
    return %c0_i32, %c0_i32_0 : i32, i32
  }
  func.func @transform_2(%arg0: i32) -> (i32, i32) {
    %c0_i32 = arith.constant 0 : i32
    %c0_i32_0 = arith.constant 0 : i32
    %c0_i32_1 = arith.constant 0 : i32
    return %c0_i32, %c0_i32_0 : i32, i32
  }
  func.func @transform_3(%arg0: i32) -> (i32, i32, i32) {
    %c0_i32 = arith.constant 0 : i32
    %c0_i32_0 = arith.constant 0 : i32
    %c0_i32_1 = arith.constant 0 : i32
    return %arg0, %c0_i32, %c0_i32_0 : i32, i32, i32
  }
}

</mosaic_0001>

<llo_original>
// kernel: hidden_layer_forward.1
$region0: #{hidden_layer_forward.1}
  #allocation0 [shape = 'u32[]', space=smem, size = 0x4, offset = 0x4, fixed_abs, tag = 'smem constant byte address 0x4 - core index']
  #allocation1 [shape = 'u32[72,128]{1,0:T(1,128)}', space=vmem, size = 0x9000, scoped, tag = 'internal scratch']
  #allocation2 [shape = 'f32[36,256]{1,0:T(8,128)}', space=vmem, size = 0xa000, scoped, tag = 'scratch operand']
  %s0 = inlined_call_operand.vmem [shape: f32[2,4,384], index: 0, kind: input, shape index: {}]
  %s1 = inlined_call_operand.vmem [shape: f32[32,36], index: 1, kind: input, shape index: {}]
  %s2 = inlined_call_operand.vmem [shape: f32[32,1], index: 2, kind: input, shape index: {}]
  %s3 = inlined_call_operand.vmem [shape: f32[2,32,256], index: 3, kind: output, shape index: {}]
  %s4 = sld [smem:[#allocation0]]
  $region22: #{hidden_layer_forward.1} parent=0
    _
  %s6 = ssub.s32 1, %s4
  %s7 = scalar_select 0, %s6, %s4
  // Predicated region
  $region2: #{hidden_layer_forward.1} parent=0 // pred_check
    _
  $region3: #{hidden_layer_forward.1} parent=0 // pred_check_branch
    %9 = sbr.rel (0) target = $region5
  $region4: #{hidden_layer_forward.1} parent=0 // pred_region
    _
  $region5: #{hidden_layer_forward.1} parent=0 // pred_fallthru
    _
  // Predicated region
  $region6: #{hidden_layer_forward.1} parent=0 // pred_check
    _
  $region7: #{hidden_layer_forward.1} parent=0 // pred_check_branch
    %11 = sbr.rel (0) target = $region9
  $region8: #{hidden_layer_forward.1} parent=0 // pred_region
    _
  $region9: #{hidden_layer_forward.1} parent=0 // pred_fallthru
    _
  // Predicated region
  $region10: #{hidden_layer_forward.1} parent=0 // pred_check
    _
  $region11: #{hidden_layer_forward.1} parent=0 // pred_check_branch
    %13 = sbr.rel (0) target = $region13
  $region12: #{hidden_layer_forward.1} parent=0 // pred_region
    _
  $region13: #{hidden_layer_forward.1} parent=0 // pred_fallthru
    _
  %v14 = vld [vmem:[%s1] sm:$0xff]
  %v15 = vld [vmem:[%s1 + $0x8] sm:$0xff]
  %v16 = vld [vmem:[%s1 + $0x10] sm:$0xff]
  %v17 = vld [vmem:[%s1 + $0x18] sm:$0xff]
  %v18 = vld [vmem:[%s2] sm:$0xff]
  %v19 = vld [vmem:[%s2 + $0x8] sm:$0xff]
  %v20 = vld [vmem:[%s2 + $0x10] sm:$0xff]
  %v21 = vld [vmem:[%s2 + $0x18] sm:$0xff]
  %v22 = vld [vmem:[%s0] sm:$0xff]
  %24 = vst [vmem:[#allocation1] ss:$2 sm:$0xff] %v22
  %v25 = vld.sshfl [vmem:[#allocation1] sm:$0xff pattern:$0x75316420]
  %v26 = vld.sshfl [vmem:[#allocation1 + $0x8] sm:$0xff pattern:$0x75316420]
  %29 = vst [vmem:[#allocation2] sm:$0xf] %v25
  %30 = vst [vmem:[#allocation2 + $0x8] sm:$0xf] %v26
  %v31 = vld [vmem:[%s0] sm:$0xff]
  %v32 = vld [vmem:[%s0 + $0x8] sm:$0xf]
  %s35 = scalar_lea.vmem [#allocation1], 1
  %36 = vst [vmem:[%s35] ss:$2 sm:$0xff] %v31
  %s37 = scalar_lea.vmem [#allocation1], 17
  %38 = vst [vmem:[%s37] ss:$2 sm:$0xff] %v32
  %v39 = vld.sshfl [vmem:[#allocation1] sm:$0xff pattern:$0x75316420]
  %v40 = vld.sshfl [vmem:[#allocation1 + $0x8] sm:$0xff pattern:$0x75316420]
  %v41 = vld.sshfl [vmem:[#allocation1 + $0x10] sm:$0xff pattern:$0x75316420]
  %42 = vrot.lane.b32.xlu0 %v39, 127
  %v43 = vpop.permute.xlu0 %42
  %44 = vrot.lane.b32.xlu0 %v40, 127
  %v45 = vpop.permute.xlu0 %44
  %46 = vrot.lane.b32.xlu0 %v41, 127
  %v47 = vpop.permute.xlu0 %46
  %vm48 = vcmask 1039360
  %v49 = vsel %vm48, %v43, %v45
  %v50 = vsel %vm48, %v45, %v47
  %53 = vst [vmem:[#allocation2] sm:$0xf0] %v49
  %54 = vst [vmem:[#allocation2 + $0x8] sm:$0xf0] %v50
  %v55 = vld [vmem:[%s0] sm:$0xff]
  %v56 = vld [vmem:[%s0 + $0x8] sm:$0xf]
  %59 = vst [vmem:[#allocation1] ss:$2 sm:$0xff] %v55
  %s60 = scalar_lea.vmem [#allocation1], 16
  %61 = vst [vmem:[%s60] ss:$2 sm:$0xff] %v56
  %v62 = vld.sshfl [vmem:[#allocation1] sm:$0xff pattern:$0x75316420]
  %v63 = vld.sshfl [vmem:[#allocation1 + $0x8] sm:$0xff pattern:$0x75316420]
  %v64 = vld.sshfl [vmem:[#allocation1 + $0x10] sm:$0xff pattern:$0x75316420]
  %65 = vrot.lane.b32.xlu0 %v62, 126
  %v66 = vpop.permute.xlu0 %65
  %67 = vrot.lane.b32.xlu0 %v63, 126
  %v68 = vpop.permute.xlu0 %67
  %69 = vrot.lane.b32.xlu0 %v64, 126
  %v70 = vpop.permute.xlu0 %69
  %vm71 = vcmask 1031168
  %v72 = vsel %vm71, %v66, %v68
  %v73 = vsel %vm71, %v68, %v70
  %76 = vst [vmem:[#allocation2 + $0x10] sm:$0xf] %v72
  %77 = vst [vmem:[#allocation2 + $0x18] sm:$0xf] %v73
  %v78 = vld [vmem:[%s0] sm:$0xff]
  %v79 = vld [vmem:[%s0 + $0x8] sm:$0xf]
  %s82 = scalar_lea.vmem [#allocation1], 1
  %83 = vst [vmem:[%s82] ss:$2 sm:$0xff] %v78
  %s84 = scalar_lea.vmem [#allocation1], 17
  %85 = vst [vmem:[%s84] ss:$2 sm:$0xff] %v79
  %v86 = vld.sshfl [vmem:[#allocation1] sm:$0xff pattern:$0x75316420]
  %v87 = vld.sshfl [vmem:[#allocation1 + $0x8] sm:$0xff pattern:$0x75316420]
  %v88 = vld.sshfl [vmem:[#allocation1 + $0x10] sm:$0xff pattern:$0x75316420]
  %89 = vrot.lane.b32.xlu0 %v86, 112
  %v90 = vpop.permute.xlu0 %89
  %91 = vrot.lane.b32.xlu0 %v87, 112
  %v92 = vpop.permute.xlu0 %91
  %93 = vrot.lane.b32.xlu0 %v88, 112
  %v94 = vpop.permute.xlu0 %93
  %vm95 = vcmask 916480
  %v96 = vsel %vm95, %v90, %v92
  %v97 = vsel %vm95, %v92, %v94
  %100 = vst [vmem:[#allocation2 + $0x10] sm:$0xf0] %v96
  %101 = vst [vmem:[#allocation2 + $0x18] sm:$0xf0] %v97
  %v102 = vld [vmem:[%s0] sm:$0xff]
  %v103 = vld [vmem:[%s0 + $0x8] sm:$0xf]
  %106 = vst [vmem:[#allocation1] ss:$2 sm:$0xff] %v102
  %s107 = scalar_lea.vmem [#allocation1], 16
  %108 = vst [vmem:[%s107] ss:$2 sm:$0xff] %v103
  %v109 = vld.sshfl [vmem:[#allocation1] sm:$0xff pattern:$0x75316420]
  %v110 = vld.sshfl [vmem:[#allocation1 + $0x8] sm:$0xff pattern:$0x75316420]
  %v111 = vld.sshfl [vmem:[#allocation1 + $0x10] sm:$0xff pattern:$0x75316420]
  %112 = vrot.lane.b32.xlu0 %v109, 111
  %v113 = vpop.permute.xlu0 %112
  %114 = vrot.lane.b32.xlu0 %v110, 111
  %v115 = vpop.permute.xlu0 %114
  %116 = vrot.lane.b32.xlu0 %v111, 111
  %v117 = vpop.permute.xlu0 %116
  %vm118 = vcmask 908288
  %v119 = vsel %vm118, %v113, %v115
  %v120 = vsel %vm118, %v115, %v117
  %123 = vst [vmem:[#allocation2 + $0x20] sm:$0xf] %v119
  %124 = vst [vmem:[#allocation2 + $0x28] sm:$0xf] %v120
  %v125 = vld [vmem:[%s0] sm:$0xff]
  %v126 = vld [vmem:[%s0 + $0x8] sm:$0xf]
  %s129 = scalar_lea.vmem [#allocation1], 1
  %130 = vst [vmem:[%s129] ss:$2 sm:$0xff] %v125
  %s131 = scalar_lea.vmem [#allocation1], 17
  %132 = vst [vmem:[%s131] ss:$2 sm:$0xff] %v126
  %v133 = vld.sshfl [vmem:[#allocation1] sm:$0xff pattern:$0x75316420]
  %v134 = vld.sshfl [vmem:[#allocation1 + $0x8] sm:$0xff pattern:$0x75316420]
  %v135 = vld.sshfl [vmem:[#allocation1 + $0x10] sm:$0xff pattern:$0x75316420]
  %136 = vrot.lane.b32.xlu0 %v133, 110
  %v137 = vpop.permute.xlu0 %136
  %138 = vrot.lane.b32.xlu0 %v134, 110
  %v139 = vpop.permute.xlu0 %138
  %140 = vrot.lane.b32.xlu0 %v135, 110
  %v141 = vpop.permute.xlu0 %140
  %vm142 = vcmask 900096
  %v143 = vsel %vm142, %v137, %v139
  %v144 = vsel %vm142, %v139, %v141
  %147 = vst [vmem:[#allocation2 + $0x20] sm:$0xf0] %v143
  %148 = vst [vmem:[#allocation2 + $0x28] sm:$0xf0] %v144
  %v149 = vld [vmem:[%s0] sm:$0xff]
  %v150 = vld [vmem:[%s0 + $0x8] sm:$0xf]
  %153 = vst [vmem:[#allocation1] ss:$2 sm:$0xff] %v149
  %s154 = scalar_lea.vmem [#allocation1], 16
  %155 = vst [vmem:[%s154] ss:$2 sm:$0xff] %v150
  %v156 = vld.sshfl [vmem:[#allocation1] sm:$0xff pattern:$0x75316420]
  %v157 = vld.sshfl [vmem:[#allocation1 + $0x8] sm:$0xff pattern:$0x75316420]
  %v158 = vld.sshfl [vmem:[#allocation1 + $0x10] sm:$0xff pattern:$0x75316420]
  %159 = vrot.lane.b32.xlu0 %v156, 96
  %v160 = vpop.permute.xlu0 %159
  %161 = vrot.lane.b32.xlu0 %v157, 96
  %v162 = vpop.permute.xlu0 %161
  %163 = vrot.lane.b32.xlu0 %v158, 96
  %v164 = vpop.permute.xlu0 %163
  %vm165 = vcmask 785408
  %v166 = vsel %vm165, %v160, %v162
  %v167 = vsel %vm165, %v162, %v164
  %170 = vst [vmem:[#allocation2 + $0x30] sm:$0xf] %v166
  %171 = vst [vmem:[#allocation2 + $0x38] sm:$0xf] %v167
  %v172 = vld [vmem:[%s0] sm:$0xff]
  %v173 = vld [vmem:[%s0 + $0x8] sm:$0xf]
  %s176 = scalar_lea.vmem [#allocation1], 1
  %177 = vst [vmem:[%s176] ss:$2 sm:$0xff] %v172
  %s178 = scalar_lea.vmem [#allocation1], 17
  %179 = vst [vmem:[%s178] ss:$2 sm:$0xff] %v173
  %v180 = vld.sshfl [vmem:[#allocation1] sm:$0xff pattern:$0x75316420]
  %v181 = vld.sshfl [vmem:[#allocation1 + $0x8] sm:$0xff pattern:$0x75316420]
  %v182 = vld.sshfl [vmem:[#allocation1 + $0x10] sm:$0xff pattern:$0x75316420]
  %183 = vrot.lane.b32.xlu0 %v180, 95
  %v184 = vpop.permute.xlu0 %183
  %185 = vrot.lane.b32.xlu0 %v181, 95
  %v186 = vpop.permute.xlu0 %185
  %187 = vrot.lane.b32.xlu0 %v182, 95
  %v188 = vpop.permute.xlu0 %187
  %vm189 = vcmask 777216
  %v190 = vsel %vm189, %v184, %v186
  %v191 = vsel %vm189, %v186, %v188
  %194 = vst [vmem:[#allocation2 + $0x30] sm:$0xf0] %v190
  %195 = vst [vmem:[#allocation2 + $0x38] sm:$0xf0] %v191
  %v196 = vld [vmem:[%s0] sm:$0xff]
  %v197 = vld [vmem:[%s0 + $0x8] sm:$0xf]
  %200 = vst [vmem:[#allocation1] ss:$2 sm:$0xff] %v196
  %s201 = scalar_lea.vmem [#allocation1], 16
  %202 = vst [vmem:[%s201] ss:$2 sm:$0xff] %v197
  %v203 = vld.sshfl [vmem:[#allocation1] sm:$0xff pattern:$0x75316420]
  %v204 = vld.sshfl [vmem:[#allocation1 + $0x8] sm:$0xff pattern:$0x75316420]
  %v205 = vld.sshfl [vmem:[#allocation1 + $0x10] sm:$0xff pattern:$0x75316420]
  %206 = vrot.lane.b32.xlu0 %v203, 94
  %v207 = vpop.permute.xlu0 %206
  %208 = vrot.lane.b32.xlu0 %v204, 94
  %v209 = vpop.permute.xlu0 %208
  %210 = vrot.lane.b32.xlu0 %v205, 94
  %v211 = vpop.permute.xlu0 %210
  %vm212 = vcmask 769024
  %v213 = vsel %vm212, %v207, %v209
  %v214 = vsel %vm212, %v209, %v211
  %217 = vst [vmem:[#allocation2 + $0x40] sm:$0xf] %v213
  %218 = vst [vmem:[#allocation2 + $0x48] sm:$0xf] %v214
  %v219 = vld [vmem:[#allocation2] sm:$0xff]
  %v220 = vld [vmem:[#allocation2 + $0x8] sm:$0xff]
  %v221 = vld [vmem:[#allocation2 + $0x10] sm:$0xff]
  %v222 = vld [vmem:[#allocation2 + $0x18] sm:$0xff]
  %v223 = vld [vmem:[#allocation2 + $0x20] sm:$0xff]
  %v224 = vld [vmem:[#allocation2 + $0x28] sm:$0xff]
  %v225 = vld [vmem:[#allocation2 + $0x30] sm:$0xff]
  %v226 = vld [vmem:[#allocation2 + $0x38] sm:$0xff]
  %v227 = vld [vmem:[#allocation2 + $0x40] sm:$0xf]
  %v228 = vld [vmem:[#allocation2 + $0x48] sm:$0xf]
  %230 = vset.pattern.permute.xlu0 0
  %231 = vperm.xlu0 %230, %v18
  %v232 = vpop.permute.xlu0 %231
  %235 = vset.pattern.permute.xlu0 0
  %236 = vperm.xlu0 %235, %v19
  %v237 = vpop.permute.xlu0 %236
  %240 = vset.pattern.permute.xlu0 0
  %241 = vperm.xlu0 %240, %v20
  %v242 = vpop.permute.xlu0 %241
  %245 = vset.pattern.permute.xlu0 0
  %246 = vperm.xlu0 %245, %v21
  %v247 = vpop.permute.xlu0 %246
  %vm249 = vcmask 293888
  %v251 = vsel %vm249, %v14, 0
  %v254 = vsel %vm249, %v15, 0
  %v257 = vsel %vm249, %v16, 0
  %v260 = vsel %vm249, %v17, 0
  %vm262 = vcmask 1043456
  %v264 = vsel %vm262, %v227, 0
  %v267 = vsel %vm262, %v228, 0
  %269 = vmatpush.msra.mxu0 0.0
  %270 = vmatpush.msra.mxu0 0.0
  %271 = vmatpush.msra.mxu0 0.0
  %272 = vmatpush.msra.mxu0 0.0
  %273 = vmatpush.msra.mxu0 0.0
  %274 = vmatpush.msra.mxu0 0.0
  %275 = vmatpush.msra.mxu0 0.0
  %276 = vmatpush.msra.mxu0 0.0
  %277 = vmatpush.msra.mxu0 0.0
  %278 = vmatpush.msra.mxu0 0.0
  %279 = vmatpush.msra.mxu0 0.0
  %280 = vmatpush.msra.mxu0 %v264
  %281 = vmatpush.msra.mxu0 %v225
  %282 = vmatpush.msra.mxu0 %v223
  %283 = vmatpush.msra.mxu0 %v221
  %284 = vmatpush.msra.mxu0 %v219
  %285 = vmatmul.f32.gmra.mxu0 %v251
  %v286 = vpop.f32.mrf.mxu0
  %v287 = vadd.f32 %v232, %v286
  %288 = vmatmul.f32.gmra.mxu0 %v254
  %v289 = vpop.f32.mrf.mxu0
  %v290 = vadd.f32 %v237, %v289
  %291 = vmatmul.f32.gmra.mxu0 %v257
  %v292 = vpop.f32.mrf.mxu0
  %v293 = vadd.f32 %v242, %v292
  %294 = vmatmul.f32.gmra.mxu0 %v260
  %v295 = vpop.f32.mrf.mxu0
  %v296 = vadd.f32 %v247, %v295
  %297 = vdwg.mxu0
  %298 = vmatpush.msra.mxu0 0.0
  %299 = vmatpush.msra.mxu0 0.0
  %300 = vmatpush.msra.mxu0 0.0
  %301 = vmatpush.msra.mxu0 0.0
  %302 = vmatpush.msra.mxu0 0.0
  %303 = vmatpush.msra.mxu0 0.0
  %304 = vmatpush.msra.mxu0 0.0
  %305 = vmatpush.msra.mxu0 0.0
  %306 = vmatpush.msra.mxu0 0.0
  %307 = vmatpush.msra.mxu0 0.0
  %308 = vmatpush.msra.mxu0 0.0
  %309 = vmatpush.msra.mxu0 %v267
  %310 = vmatpush.msra.mxu0 %v226
  %311 = vmatpush.msra.mxu0 %v224
  %312 = vmatpush.msra.mxu0 %v222
  %313 = vmatpush.msra.mxu0 %v220
  %314 = vmatmul.f32.gmra.mxu0 %v251
  %v315 = vpop.f32.mrf.mxu0
  %v316 = vadd.f32 %v232, %v315
  %317 = vmatmul.f32.gmra.mxu0 %v254
  %v318 = vpop.f32.mrf.mxu0
  %v319 = vadd.f32 %v237, %v318
  %320 = vmatmul.f32.gmra.mxu0 %v257
  %v321 = vpop.f32.mrf.mxu0
  %v322 = vadd.f32 %v242, %v321
  %323 = vmatmul.f32.gmra.mxu0 %v260
  %v324 = vpop.f32.mrf.mxu0
  %v325 = vadd.f32 %v247, %v324
  %326 = vdwg.mxu0
  %v327 = vmax.f32 %v287, 0.0
  %v328 = vmax.f32 %v316, 0.0
  %v329 = vmax.f32 %v290, 0.0
  %v330 = vmax.f32 %v319, 0.0
  %v331 = vmax.f32 %v293, 0.0
  %v332 = vmax.f32 %v322, 0.0
  %v333 = vmax.f32 %v296, 0.0
  %v334 = vmax.f32 %v325, 0.0
  %335 = vst [vmem:[%s3] sm:$0xff] %v327
  %336 = vst [vmem:[%s3 + $0x8] sm:$0xff] %v328
  %337 = vst [vmem:[%s3 + $0x10] sm:$0xff] %v329
  %338 = vst [vmem:[%s3 + $0x18] sm:$0xff] %v330
  %339 = vst [vmem:[%s3 + $0x20] sm:$0xff] %v331
  %340 = vst [vmem:[%s3 + $0x28] sm:$0xff] %v332
  %341 = vst [vmem:[%s3 + $0x30] sm:$0xff] %v333
  %342 = vst [vmem:[%s3 + $0x38] sm:$0xff] %v334
  %s343 = scalar_lea.vmem %s0, 12
  %v344 = vld [vmem:[%s343] sm:$0xff]
  %346 = vst [vmem:[#allocation1] ss:$2 sm:$0xff] %v344
  %v347 = vld.sshfl [vmem:[#allocation1] sm:$0xff pattern:$0x75316420]
  %v348 = vld.sshfl [vmem:[#allocation1 + $0x8] sm:$0xff pattern:$0x75316420]
  %351 = vst [vmem:[#allocation2] sm:$0xf] %v347
  %352 = vst [vmem:[#allocation2 + $0x8] sm:$0xf] %v348
  %v353 = vld [vmem:[%s343] sm:$0xff]
  %v354 = vld [vmem:[%s343 + $0x8] sm:$0xf]
  %s357 = scalar_lea.vmem [#allocation1], 1
  %358 = vst [vmem:[%s357] ss:$2 sm:$0xff] %v353
  %s359 = scalar_lea.vmem [#allocation1], 17
  %360 = vst [vmem:[%s359] ss:$2 sm:$0xff] %v354
  %v361 = vld.sshfl [vmem:[#allocation1] sm:$0xff pattern:$0x75316420]
  %v362 = vld.sshfl [vmem:[#allocation1 + $0x8] sm:$0xff pattern:$0x75316420]
  %v363 = vld.sshfl [vmem:[#allocation1 + $0x10] sm:$0xff pattern:$0x75316420]
  %364 = vrot.lane.b32.xlu0 %v361, 127
  %v365 = vpop.permute.xlu0 %364
  %366 = vrot.lane.b32.xlu0 %v362, 127
  %v367 = vpop.permute.xlu0 %366
  %368 = vrot.lane.b32.xlu0 %v363, 127
  %v369 = vpop.permute.xlu0 %368
  %v370 = vsel %vm48, %v365, %v367
  %v371 = vsel %vm48, %v367, %v369
  %374 = vst [vmem:[#allocation2] sm:$0xf0] %v370
  %375 = vst [vmem:[#allocation2 + $0x8] sm:$0xf0] %v371
  %v376 = vld [vmem:[%s343] sm:$0xff]
  %v377 = vld [vmem:[%s343 + $0x8] sm:$0xf]
  %380 = vst [vmem:[#allocation1] ss:$2 sm:$0xff] %v376
  %s381 = scalar_lea.vmem [#allocation1], 16
  %382 = vst [vmem:[%s381] ss:$2 sm:$0xff] %v377
  %v383 = vld.sshfl [vmem:[#allocation1] sm:$0xff pattern:$0x75316420]
  %v384 = vld.sshfl [vmem:[#allocation1 + $0x8] sm:$0xff pattern:$0x75316420]
  %v385 = vld.sshfl [vmem:[#allocation1 + $0x10] sm:$0xff pattern:$0x75316420]
  %386 = vrot.lane.b32.xlu0 %v383, 126
  %v387 = vpop.permute.xlu0 %386
  %388 = vrot.lane.b32.xlu0 %v384, 126
  %v389 = vpop.permute.xlu0 %388
  %390 = vrot.lane.b32.xlu0 %v385, 126
  %v391 = vpop.permute.xlu0 %390
  %v392 = vsel %vm71, %v387, %v389
  %v393 = vsel %vm71, %v389, %v391
  %396 = vst [vmem:[#allocation2 + $0x10] sm:$0xf] %v392
  %397 = vst [vmem:[#allocation2 + $0x18] sm:$0xf] %v393
  %v398 = vld [vmem:[%s343] sm:$0xff]
  %v399 = vld [vmem:[%s343 + $0x8] sm:$0xf]
  %s402 = scalar_lea.vmem [#allocation1], 1
  %403 = vst [vmem:[%s402] ss:$2 sm:$0xff] %v398
  %s404 = scalar_lea.vmem [#allocation1], 17
  %405 = vst [vmem:[%s404] ss:$2 sm:$0xff] %v399
  %v406 = vld.sshfl [vmem:[#allocation1] sm:$0xff pattern:$0x75316420]
  %v407 = vld.sshfl [vmem:[#allocation1 + $0x8] sm:$0xff pattern:$0x75316420]
  %v408 = vld.sshfl [vmem:[#allocation1 + $0x10] sm:$0xff pattern:$0x75316420]
  %409 = vrot.lane.b32.xlu0 %v406, 112
  %v410 = vpop.permute.xlu0 %409
  %411 = vrot.lane.b32.xlu0 %v407, 112
  %v412 = vpop.permute.xlu0 %411
  %413 = vrot.lane.b32.xlu0 %v408, 112
  %v414 = vpop.permute.xlu0 %413
  %v415 = vsel %vm95, %v410, %v412
  %v416 = vsel %vm95, %v412, %v414
  %419 = vst [vmem:[#allocation2 + $0x10] sm:$0xf0] %v415
  %420 = vst [vmem:[#allocation2 + $0x18] sm:$0xf0] %v416
  %v421 = vld [vmem:[%s343] sm:$0xff]
  %v422 = vld [vmem:[%s343 + $0x8] sm:$0xf]
  %425 = vst [vmem:[#allocation1] ss:$2 sm:$0xff] %v421
  %s426 = scalar_lea.vmem [#allocation1], 16
  %427 = vst [vmem:[%s426] ss:$2 sm:$0xff] %v422
  %v428 = vld.sshfl [vmem:[#allocation1] sm:$0xff pattern:$0x75316420]
  %v429 = vld.sshfl [vmem:[#allocation1 + $0x8] sm:$0xff pattern:$0x75316420]
  %v430 = vld.sshfl [vmem:[#allocation1 + $0x10] sm:$0xff pattern:$0x75316420]
  %431 = vrot.lane.b32.xlu0 %v428, 111
  %v432 = vpop.permute.xlu0 %431
  %433 = vrot.lane.b32.xlu0 %v429, 111
  %v434 = vpop.permute.xlu0 %433
  %435 = vrot.lane.b32.xlu0 %v430, 111
  %v436 = vpop.permute.xlu0 %435
  %v437 = vsel %vm118, %v432, %v434
  %v438 = vsel %vm118, %v434, %v436
  %441 = vst [vmem:[#allocation2 + $0x20] sm:$0xf] %v437
  %442 = vst [vmem:[#allocation2 + $0x28] sm:$0xf] %v438
  %v443 = vld [vmem:[%s343] sm:$0xff]
  %v444 = vld [vmem:[%s343 + $0x8] sm:$0xf]
  %s447 = scalar_lea.vmem [#allocation1], 1
  %448 = vst [vmem:[%s447] ss:$2 sm:$0xff] %v443
  %s449 = scalar_lea.vmem [#allocation1], 17
  %450 = vst [vmem:[%s449] ss:$2 sm:$0xff] %v444
  %v451 = vld.sshfl [vmem:[#allocation1] sm:$0xff pattern:$0x75316420]
  %v452 = vld.sshfl [vmem:[#allocation1 + $0x8] sm:$0xff pattern:$0x75316420]
  %v453 = vld.sshfl [vmem:[#allocation1 + $0x10] sm:$0xff pattern:$0x75316420]
  %454 = vrot.lane.b32.xlu0 %v451, 110
  %v455 = vpop.permute.xlu0 %454
  %456 = vrot.lane.b32.xlu0 %v452, 110
  %v457 = vpop.permute.xlu0 %456
  %458 = vrot.lane.b32.xlu0 %v453, 110
  %v459 = vpop.permute.xlu0 %458
  %v460 = vsel %vm142, %v455, %v457
  %v461 = vsel %vm142, %v457, %v459
  %464 = vst [vmem:[#allocation2 + $0x20] sm:$0xf0] %v460
  %465 = vst [vmem:[#allocation2 + $0x28] sm:$0xf0] %v461
  %v466 = vld [vmem:[%s343] sm:$0xff]
  %v467 = vld [vmem:[%s343 + $0x8] sm:$0xf]
  %470 = vst [vmem:[#allocation1] ss:$2 sm:$0xff] %v466
  %s471 = scalar_lea.vmem [#allocation1], 16
  %472 = vst [vmem:[%s471] ss:$2 sm:$0xff] %v467
  %v473 = vld.sshfl [vmem:[#allocation1] sm:$0xff pattern:$0x75316420]
  %v474 = vld.sshfl [vmem:[#allocation1 + $0x8] sm:$0xff pattern:$0x75316420]
  %v475 = vld.sshfl [vmem:[#allocation1 + $0x10] sm:$0xff pattern:$0x75316420]
  %476 = vrot.lane.b32.xlu0 %v473, 96
  %v477 = vpop.permute.xlu0 %476
  %478 = vrot.lane.b32.xlu0 %v474, 96
  %v479 = vpop.permute.xlu0 %478
  %480 = vrot.lane.b32.xlu0 %v475, 96
  %v481 = vpop.permute.xlu0 %480
  %v482 = vsel %vm165, %v477, %v479
  %v483 = vsel %vm165, %v479, %v481
  %486 = vst [vmem:[#allocation2 + $0x30] sm:$0xf] %v482
  %487 = vst [vmem:[#allocation2 + $0x38] sm:$0xf] %v483
  %v488 = vld [vmem:[%s343] sm:$0xff]
  %v489 = vld [vmem:[%s343 + $0x8] sm:$0xf]
  %s492 = scalar_lea.vmem [#allocation1], 1
  %493 = vst [vmem:[%s492] ss:$2 sm:$0xff] %v488
  %s494 = scalar_lea.vmem [#allocation1], 17
  %495 = vst [vmem:[%s494] ss:$2 sm:$0xff] %v489
  %v496 = vld.sshfl [vmem:[#allocation1] sm:$0xff pattern:$0x75316420]
  %v497 = vld.sshfl [vmem:[#allocation1 + $0x8] sm:$0xff pattern:$0x75316420]
  %v498 = vld.sshfl [vmem:[#allocation1 + $0x10] sm:$0xff pattern:$0x75316420]
  %499 = vrot.lane.b32.xlu0 %v496, 95
  %v500 = vpop.permute.xlu0 %499
  %501 = vrot.lane.b32.xlu0 %v497, 95
  %v502 = vpop.permute.xlu0 %501
  %503 = vrot.lane.b32.xlu0 %v498, 95
  %v504 = vpop.permute.xlu0 %503
  %v505 = vsel %vm189, %v500, %v502
  %v506 = vsel %vm189, %v502, %v504
  %509 = vst [vmem:[#allocation2 + $0x30] sm:$0xf0] %v505
  %510 = vst [vmem:[#allocation2 + $0x38] sm:$0xf0] %v506
  %v511 = vld [vmem:[%s343] sm:$0xff]
  %v512 = vld [vmem:[%s343 + $0x8] sm:$0xf]
  %515 = vst [vmem:[#allocation1] ss:$2 sm:$0xff] %v511
  %s516 = scalar_lea.vmem [#allocation1], 16
  %517 = vst [vmem:[%s516] ss:$2 sm:$0xff] %v512
  %v518 = vld.sshfl [vmem:[#allocation1] sm:$0xff pattern:$0x75316420]
  %v519 = vld.sshfl [vmem:[#allocation1 + $0x8] sm:$0xff pattern:$0x75316420]
  %v520 = vld.sshfl [vmem:[#allocation1 + $0x10] sm:$0xff pattern:$0x75316420]
  %521 = vrot.lane.b32.xlu0 %v518, 94
  %v522 = vpop.permute.xlu0 %521
  %523 = vrot.lane.b32.xlu0 %v519, 94
  %v524 = vpop.permute.xlu0 %523
  %525 = vrot.lane.b32.xlu0 %v520, 94
  %v526 = vpop.permute.xlu0 %525
  %v527 = vsel %vm212, %v522, %v524
  %v528 = vsel %vm212, %v524, %v526
  %531 = vst [vmem:[#allocation2 + $0x40] sm:$0xf] %v527
  %532 = vst [vmem:[#allocation2 + $0x48] sm:$0xf] %v528
  %v533 = vld [vmem:[#allocation2] sm:$0xff]
  %v534 = vld [vmem:[#allocation2 + $0x8] sm:$0xff]
  %v535 = vld [vmem:[#allocation2 + $0x10] sm:$0xff]
  %v536 = vld [vmem:[#allocation2 + $0x18] sm:$0xff]
  %v537 = vld [vmem:[#allocation2 + $0x20] sm:$0xff]
  %v538 = vld [vmem:[#allocation2 + $0x28] sm:$0xff]
  %v539 = vld [vmem:[#allocation2 + $0x30] sm:$0xff]
  %v540 = vld [vmem:[#allocation2 + $0x38] sm:$0xff]
  %v541 = vld [vmem:[#allocation2 + $0x40] sm:$0xf]
  %v542 = vld [vmem:[#allocation2 + $0x48] sm:$0xf]
  %v544 = vsel %vm262, %v541, 0
  %v547 = vsel %vm262, %v542, 0
  %549 = vmatpush.msra.mxu0 0.0
  %550 = vmatpush.msra.mxu0 0.0
  %551 = vmatpush.msra.mxu0 0.0
  %552 = vmatpush.msra.mxu0 0.0
  %553 = vmatpush.msra.mxu0 0.0
  %554 = vmatpush.msra.mxu0 0.0
  %555 = vmatpush.msra.mxu0 0.0
  %556 = vmatpush.msra.mxu0 0.0
  %557 = vmatpush.msra.mxu0 0.0
  %558 = vmatpush.msra.mxu0 0.0
  %559 = vmatpush.msra.mxu0 0.0
  %560 = vmatpush.msra.mxu0 %v544
  %561 = vmatpush.msra.mxu0 %v539
  %562 = vmatpush.msra.mxu0 %v537
  %563 = vmatpush.msra.mxu0 %v535
  %564 = vmatpush.msra.mxu0 %v533
  %565 = vmatmul.f32.gmra.mxu0 %v251
  %v566 = vpop.f32.mrf.mxu0
  %v567 = vadd.f32 %v232, %v566
  %568 = vmatmul.f32.gmra.mxu0 %v254
  %v569 = vpop.f32.mrf.mxu0
  %v570 = vadd.f32 %v237, %v569
  %571 = vmatmul.f32.gmra.mxu0 %v257
  %v572 = vpop.f32.mrf.mxu0
  %v573 = vadd.f32 %v242, %v572
  %574 = vmatmul.f32.gmra.mxu0 %v260
  %v575 = vpop.f32.mrf.mxu0
  %v576 = vadd.f32 %v247, %v575
  %577 = vdwg.mxu0
  %578 = vmatpush.msra.mxu0 0.0
  %579 = vmatpush.msra.mxu0 0.0
  %580 = vmatpush.msra.mxu0 0.0
  %581 = vmatpush.msra.mxu0 0.0
  %582 = vmatpush.msra.mxu0 0.0
  %583 = vmatpush.msra.mxu0 0.0
  %584 = vmatpush.msra.mxu0 0.0
  %585 = vmatpush.msra.mxu0 0.0
  %586 = vmatpush.msra.mxu0 0.0
  %587 = vmatpush.msra.mxu0 0.0
  %588 = vmatpush.msra.mxu0 0.0
  %589 = vmatpush.msra.mxu0 %v547
  %590 = vmatpush.msra.mxu0 %v540
  %591 = vmatpush.msra.mxu0 %v538
  %592 = vmatpush.msra.mxu0 %v536
  %593 = vmatpush.msra.mxu0 %v534
  %594 = vmatmul.f32.gmra.mxu0 %v251
  %v595 = vpop.f32.mrf.mxu0
  %v596 = vadd.f32 %v232, %v595
  %597 = vmatmul.f32.gmra.mxu0 %v254
  %v598 = vpop.f32.mrf.mxu0
  %v599 = vadd.f32 %v237, %v598
  %600 = vmatmul.f32.gmra.mxu0 %v257
  %v601 = vpop.f32.mrf.mxu0
  %v602 = vadd.f32 %v242, %v601
  %603 = vmatmul.f32.gmra.mxu0 %v260
  %v604 = vpop.f32.mrf.mxu0
  %v605 = vadd.f32 %v247, %v604
  %606 = vdwg.mxu0
  %v607 = vmax.f32 %v567, 0.0
  %v608 = vmax.f32 %v596, 0.0
  %v609 = vmax.f32 %v570, 0.0
  %v610 = vmax.f32 %v599, 0.0
  %v611 = vmax.f32 %v573, 0.0
  %v612 = vmax.f32 %v602, 0.0
  %v613 = vmax.f32 %v576, 0.0
  %v614 = vmax.f32 %v605, 0.0
  %s615 = scalar_lea.vmem %s3, 64
  %616 = vst [vmem:[%s615] sm:$0xff] %v607
  %617 = vst [vmem:[%s615 + $0x8] sm:$0xff] %v608
  %618 = vst [vmem:[%s615 + $0x10] sm:$0xff] %v609
  %619 = vst [vmem:[%s615 + $0x18] sm:$0xff] %v610
  %620 = vst [vmem:[%s615 + $0x20] sm:$0xff] %v611
  %621 = vst [vmem:[%s615 + $0x28] sm:$0xff] %v612
  %622 = vst [vmem:[%s615 + $0x30] sm:$0xff] %v613
  %623 = vst [vmem:[%s615 + $0x38] sm:$0xff] %v614
  // Predicated region
  $region14: #{hidden_layer_forward.1} parent=0 // pred_check
    _
  $region15: #{hidden_layer_forward.1} parent=0 // pred_check_branch
    %625 = sbr.rel (0) target = $region17
  $region16: #{hidden_layer_forward.1} parent=0 // pred_region
    _
  $region17: #{hidden_layer_forward.1} parent=0 // pred_fallthru
    _
  // Predicated region
  $region18: #{hidden_layer_forward.1} parent=0 // pred_check
    _
  $region19: #{hidden_layer_forward.1} parent=0 // pred_check_branch
    %627 = sbr.rel (0) target = $region21
  $region20: #{hidden_layer_forward.1} parent=0 // pred_region
    _
  $region21: #{hidden_layer_forward.1} parent=0 // pred_fallthru
    _

</llo_original>
